<compile_context>
chip_gen: v7x
topology: tpu7x:2x2x1
jax: 0.10.0
libtpu: 0.0.40
codegen_flags: <defaults>
</compile_context>

<pallas_src>
import functools

import jax
import jax.numpy as jnp
from jax.experimental import pallas as pl
from jax.experimental.pallas import tpu as pltpu


LANE = 128  # f32/bf16 lane width of a vreg


def _round_up(n, m):
    return ((n + m - 1) // m) * m


def _cdiv(a, b):
    return (a + b - 1) // b


def _leaky_relu(x, negative_slope=0.2):
    return jnp.where(x > 0, x, negative_slope * x)


def encoder_kernel(x_ref,
                   w1_ref, b1_ref,
                   w2_ref, b2_ref,
                   wh_ref, bh_ref,
                   out_ref):
    # x tile: [TB, D] f32 (cast to bf16 here); weights bf16; biases f32;
    # all matmuls accumulate in f32; bias-add / LeakyReLU in f32.
    x = x_ref[...].astype(jnp.bfloat16)

    h1 = jnp.dot(x, w1_ref[...], preferred_element_type=jnp.float32)
    h1 = _leaky_relu(h1 + b1_ref[...])

    h2 = jnp.dot(h1.astype(jnp.bfloat16), w2_ref[...],
                 preferred_element_type=jnp.float32)
    h2 = _leaky_relu(h2 + b2_ref[...])

    # fused mean/std head: one lane-dense [TB, L2_pad] output
    out = jnp.dot(h2.astype(jnp.bfloat16), wh_ref[...],
                  preferred_element_type=jnp.float32) + bh_ref[...]

    out_ref[...] = out.astype(out_ref.dtype)


def init_params(key, input_dim, hidden_dim, latent_dim):
    """f32 master params, PyTorch-style init, stored as [in, out] (weight.T)."""
    ks = jax.random.split(key, 8)

    def linear(kw, kb, fan_in, fan_out):
        bound = 1.0 / jnp.sqrt(fan_in)
        w = jax.random.uniform(kw, (fan_in, fan_out), jnp.float32, -bound, bound)
        b = jax.random.uniform(kb, (1, fan_out), jnp.float32, -bound, bound)
        return w, b

    w1, b1 = linear(ks[0], ks[1], input_dim, hidden_dim)
    w2, b2 = linear(ks[2], ks[3], hidden_dim, hidden_dim)
    wm, bm = linear(ks[4], ks[5], hidden_dim, latent_dim)
    ws, bs = linear(ks[6], ks[7], hidden_dim, latent_dim)
    return dict(w1=w1, b1=b1, w2=w2, b2=b2, wm=wm, bm=bm, ws=ws, bs=bs)


def prepare_params(p):
    """Fuse mean/std heads, zero-pad *output* feature dims to lane multiples,
    cast matmul weights to bf16 (biases stay f32 for the f32 accumulator add).
    The layer-1 contraction dim D is deliberately NOT padded."""
    input_dim = p["w1"].shape[0]
    hidden_dim = p["w1"].shape[1]
    latent_dim = p["wm"].shape[1]

    h_pad = _round_up(hidden_dim, LANE)
    l2_pad = _round_up(2 * latent_dim, LANE)

    def pad2(a, rows, cols):
        return jnp.pad(a, ((0, rows - a.shape[0]), (0, cols - a.shape[1])))

    w1 = pad2(p["w1"], input_dim, h_pad).astype(jnp.bfloat16)   # [D, H_pad]
    b1 = pad2(p["b1"], 1, h_pad).astype(jnp.float32)
    w2 = pad2(p["w2"], h_pad, h_pad).astype(jnp.bfloat16)
    b2 = pad2(p["b2"], 1, h_pad).astype(jnp.float32)
    # fused head: [H, 2L] weight, [1, 2L] bias, then pad 2L -> l2_pad
    wh = pad2(jnp.concatenate([p["wm"], p["ws"]], axis=1), h_pad, l2_pad
              ).astype(jnp.bfloat16)
    bh = pad2(jnp.concatenate([p["bm"], p["bs"]], axis=1), 1, l2_pad
              ).astype(jnp.float32)
    # NOTE: no Python ints in this dict -- everything that crosses the jit
    # boundary is an array; padded dims are re-derived from static shapes.
    return dict(w1=w1, b1=b1, w2=w2, b2=b2, wh=wh, bh=bh)


@functools.partial(jax.jit, static_argnames=("latent_dim", "tb"))
def encoder_forward(x, pp, latent_dim, tb=1024):
    """x: [B, input_dim] f32. Returns (mean, std), each [B, latent_dim] f32."""
    B, D = x.shape
    d_in, h_pad = pp["w1"].shape          # static shapes -> Python ints
    l2_pad = pp["wh"].shape[1]
    assert d_in == D, "x feature dim must match fc1 input dim"

    # Batch tile: multiple of 8 (sublanes); for B > 8 guarantee >= 2 grid
    # steps so v7x's two TensorCores both run and DMA/compute pipelining
    # exists; cap at (rounded) `tb` rows for large B.
    tb8 = max(8, _round_up(tb, 8))
    if B <= 8:
        TB = _round_up(max(B, 1), 8)
    else:
        TB = min(tb8, _round_up(_cdiv(B, 2), 8))
    b_pad = _round_up(B, TB)

    # Only pad the batch dim (single cheap pad, no full zeros+scatter pass;
    # no-op when B is already a multiple of TB, e.g. the demo below).
    xp = x if b_pad == B else jnp.pad(x, ((0, b_pad - B), (0, 0)))

    grid = (b_pad // TB,)

    flops = 2 * b_pad * (D * h_pad + h_pad * h_pad + h_pad * l2_pad)
    bytes_accessed = (
        b_pad * D * 4                          # x (f32, unpadded feature dim)
        + D * h_pad * 2 + h_pad * 4            # w1 + b1
        + h_pad * h_pad * 2 + h_pad * 4        # w2 + b2
        + h_pad * l2_pad * 2 + l2_pad * 4      # wh + bh
        + b_pad * l2_pad * 2                   # fused output (bf16)
    )

    # Weight/bias specs are grid-invariant (index_map -> (0,0)) so they stay
    # VMEM-resident across batch tiles.  At toy hidden sizes this is ~100 KiB;
    # if hidden_dim grows to multi-K, consider pl.Buffered(1) on these specs /
    # raising vmem_limit_bytes for v7x's smaller VMEM.
    out = pl.pallas_call(
        encoder_kernel,
        out_shape=jax.ShapeDtypeStruct((b_pad, l2_pad), jnp.bfloat16),
        grid=grid,
        in_specs=[
            pl.BlockSpec((TB, D), lambda i: (i, 0)),          # x tile (full D)
            pl.BlockSpec((D, h_pad), lambda i: (0, 0)),       # w1 (resident)
            pl.BlockSpec((1, h_pad), lambda i: (0, 0)),       # b1
            pl.BlockSpec((h_pad, h_pad), lambda i: (0, 0)),   # w2
            pl.BlockSpec((1, h_pad), lambda i: (0, 0)),       # b2
            pl.BlockSpec((h_pad, l2_pad), lambda i: (0, 0)),  # wh (fused heads)
            pl.BlockSpec((1, l2_pad), lambda i: (0, 0)),      # bh
        ],
        out_specs=pl.BlockSpec((TB, l2_pad), lambda i: (i, 0)),
        compiler_params=pltpu.CompilerParams(
            dimension_semantics=("parallel",)),
        cost_estimate=pl.CostEstimate(
            flops=flops, transcendentals=0, bytes_accessed=bytes_accessed),
    )(xp, pp["w1"], pp["b1"], pp["w2"], pp["b2"], pp["wh"], pp["bh"])

    fused = out[:B, :2 * latent_dim].astype(jnp.float32)
    mean = fused[:, :latent_dim]
    std = fused[:, latent_dim:]
    return mean, std


def reference_forward(x, p):
    """Pure-JAX f32 reference mirroring the PyTorch forward."""
    lrelu = lambda v: jnp.where(v > 0, v, 0.2 * v)
    h1 = lrelu(x @ p["w1"] + p["b1"])
    h2 = lrelu(h1 @ p["w2"] + p["b2"])
    return h2 @ p["wm"] + p["bm"], h2 @ p["ws"] + p["bs"]


if __name__ == "__main__":
    key = jax.random.PRNGKey(0)
    k_x, k_p = jax.random.split(key)

    B, input_dim, hidden_dim, latent_dim = 64, 32, 64, 16
    x = jax.random.normal(k_x, (B, input_dim), jnp.float32)

    params = init_params(k_p, input_dim, hidden_dim, latent_dim)
    pp = prepare_params(params)

    mean, std = encoder_forward(x, pp, latent_dim=latent_dim)
    jax.block_until_ready((mean, std))

    # correctness check against pure-JAX f32 reference (bf16 matmul inputs and
    # bf16 output writeback -> bf16-level tolerance)
    mean_ref, std_ref = reference_forward(x, params)
    assert mean.shape == (B, latent_dim) and std.shape == (B, latent_dim)
    assert jnp.allclose(mean, mean_ref, atol=5e-2, rtol=5e-2), (
        float(jnp.max(jnp.abs(mean - mean_ref))))
    assert jnp.allclose(std, std_ref, atol=5e-2, rtol=5e-2), (
        float(jnp.max(jnp.abs(std - std_ref))))

    print("KERNEL_OK")
</pallas_src>

<mosaic_0001>
module attributes {stable_mosaic.version = 11 : i64} {
  func.func @encoder_kernel(%arg0: i32, %arg1: memref<32x32xf32, #tpu.memory_space<vmem>>, %arg2: memref<32x128xbf16, #tpu.memory_space<vmem>>, %arg3: memref<1x128xf32, #tpu.memory_space<vmem>>, %arg4: memref<128x128xbf16, #tpu.memory_space<vmem>>, %arg5: memref<1x128xf32, #tpu.memory_space<vmem>>, %arg6: memref<128x128xbf16, #tpu.memory_space<vmem>>, %arg7: memref<1x128xf32, #tpu.memory_space<vmem>>, %arg8: memref<32x128xbf16, #tpu.memory_space<vmem>>) attributes {dimension_semantics = [#tpu.dimension_semantics<parallel>], iteration_bounds = array<i64: 2>, scalar_prefetch = 0 : i64, scratch_operands = 0 : i64, tpu.core_type = #tpu.core_type<tc>, window_params = [{transform_indices = @transform_0, window_bounds = array<i64: 32, 32>}, {pipeline_mode = #tpu.pipeline_mode<synchronous>, transform_indices = @transform_1, window_bounds = array<i64: 32, 128>}, {pipeline_mode = #tpu.pipeline_mode<synchronous>, transform_indices = @transform_2, window_bounds = array<i64: 1, 128>}, {pipeline_mode = #tpu.pipeline_mode<synchronous>, transform_indices = @transform_3, window_bounds = array<i64: 128, 128>}, {pipeline_mode = #tpu.pipeline_mode<synchronous>, transform_indices = @transform_4, window_bounds = array<i64: 1, 128>}, {pipeline_mode = #tpu.pipeline_mode<synchronous>, transform_indices = @transform_5, window_bounds = array<i64: 128, 128>}, {pipeline_mode = #tpu.pipeline_mode<synchronous>, transform_indices = @transform_6, window_bounds = array<i64: 1, 128>}, {transform_indices = @transform_7, window_bounds = array<i64: 32, 128>}]} {
    %c0 = arith.constant 0 : index
    %c0_0 = arith.constant 0 : index
    %0 = vector.load %arg1[%c0, %c0_0] : memref<32x32xf32, #tpu.memory_space<vmem>>, vector<32x32xf32>
    %1 = arith.truncf %0 : vector<32x32xf32> to vector<32x32xbf16>
    %c0_1 = arith.constant 0 : index
    %c0_2 = arith.constant 0 : index
    %2 = vector.load %arg2[%c0_1, %c0_2] : memref<32x128xbf16, #tpu.memory_space<vmem>>, vector<32x128xbf16>
    %cst = arith.constant dense<0.000000e+00> : vector<32x128xf32>
    %3 = tpu.matmul %1, %2, %cst {dimension_numbers = #tpu.dot_dimension_numbers<[1], [0], [0], [1], [0, 0, 1, 1], [], []>} : vector<32x32xbf16>, vector<32x128xbf16>, vector<32x128xf32> -> vector<32x128xf32>
    %c0_3 = arith.constant 0 : index
    %c0_4 = arith.constant 0 : index
    %4 = vector.load %arg3[%c0_3, %c0_4] : memref<1x128xf32, #tpu.memory_space<vmem>>, vector<1x128xf32>
    %5 = vector.broadcast %4 : vector<1x128xf32> to vector<32x128xf32>
    %6 = arith.addf %3, %5 : vector<32x128xf32>
    %cst_5 = arith.constant 0.000000e+00 : f32
    %7 = vector.broadcast %cst_5 : f32 to vector<32x128xf32>
    %8 = arith.cmpf ogt, %6, %7 : vector<32x128xf32>
    %cst_6 = arith.constant 2.000000e-01 : f32
    %9 = vector.broadcast %cst_6 : f32 to vector<32x128xf32>
    %10 = arith.mulf %9, %6 : vector<32x128xf32>
    %11 = arith.select %8, %6, %10 : vector<32x128xi1>, vector<32x128xf32>
    %12 = arith.truncf %11 : vector<32x128xf32> to vector<32x128xbf16>
    %c0_7 = arith.constant 0 : index
    %c0_8 = arith.constant 0 : index
    %13 = vector.load %arg4[%c0_7, %c0_8] : memref<128x128xbf16, #tpu.memory_space<vmem>>, vector<128x128xbf16>
    %cst_9 = arith.constant dense<0.000000e+00> : vector<32x128xf32>
    %14 = tpu.matmul %12, %13, %cst_9 {dimension_numbers = #tpu.dot_dimension_numbers<[1], [0], [0], [1], [0, 0, 1, 1], [], []>} : vector<32x128xbf16>, vector<128x128xbf16>, vector<32x128xf32> -> vector<32x128xf32>
    %c0_10 = arith.constant 0 : index
    %c0_11 = arith.constant 0 : index
    %15 = vector.load %arg5[%c0_10, %c0_11] : memref<1x128xf32, #tpu.memory_space<vmem>>, vector<1x128xf32>
    %16 = vector.broadcast %15 : vector<1x128xf32> to vector<32x128xf32>
    %17 = arith.addf %14, %16 : vector<32x128xf32>
    %cst_12 = arith.constant 0.000000e+00 : f32
    %18 = vector.broadcast %cst_12 : f32 to vector<32x128xf32>
    %19 = arith.cmpf ogt, %17, %18 : vector<32x128xf32>
    %cst_13 = arith.constant 2.000000e-01 : f32
    %20 = vector.broadcast %cst_13 : f32 to vector<32x128xf32>
    %21 = arith.mulf %20, %17 : vector<32x128xf32>
    %22 = arith.select %19, %17, %21 : vector<32x128xi1>, vector<32x128xf32>
    %23 = arith.truncf %22 : vector<32x128xf32> to vector<32x128xbf16>
    %c0_14 = arith.constant 0 : index
    %c0_15 = arith.constant 0 : index
    %24 = vector.load %arg6[%c0_14, %c0_15] : memref<128x128xbf16, #tpu.memory_space<vmem>>, vector<128x128xbf16>
    %cst_16 = arith.constant dense<0.000000e+00> : vector<32x128xf32>
    %25 = tpu.matmul %23, %24, %cst_16 {dimension_numbers = #tpu.dot_dimension_numbers<[1], [0], [0], [1], [0, 0, 1, 1], [], []>} : vector<32x128xbf16>, vector<128x128xbf16>, vector<32x128xf32> -> vector<32x128xf32>
    %c0_17 = arith.constant 0 : index
    %c0_18 = arith.constant 0 : index
    %26 = vector.load %arg7[%c0_17, %c0_18] : memref<1x128xf32, #tpu.memory_space<vmem>>, vector<1x128xf32>
    %27 = vector.broadcast %26 : vector<1x128xf32> to vector<32x128xf32>
    %28 = arith.addf %25, %27 : vector<32x128xf32>
    %29 = arith.truncf %28 : vector<32x128xf32> to vector<32x128xbf16>
    %c0_19 = arith.constant 0 : index
    %c0_20 = arith.constant 0 : index
    %30 = vector.load %arg8[%c0_19, %c0_20] : memref<32x128xbf16, #tpu.memory_space<vmem>>, vector<32x128xbf16>
    tpu.vector_store %arg8[%c0_19, %c0_20], %29 {strides = array<i32>} : memref<32x128xbf16, #tpu.memory_space<vmem>>, vector<32x128xbf16>,
    return
  }
  func.func @transform_0(%arg0: i32) -> (i32, i32) {
    %c0_i32 = arith.constant 0 : i32
    %c0_i32_0 = arith.constant 0 : i32
    return %arg0, %c0_i32 : i32, i32
  }
  func.func @transform_1(%arg0: i32) -> (i32, i32) {
    %c0_i32 = arith.constant 0 : i32
    %c0_i32_0 = arith.constant 0 : i32
    %c0_i32_1 = arith.constant 0 : i32
    return %c0_i32, %c0_i32_0 : i32, i32
  }
  func.func @transform_2(%arg0: i32) -> (i32, i32) {
    %c0_i32 = arith.constant 0 : i32
    %c0_i32_0 = arith.constant 0 : i32
    %c0_i32_1 = arith.constant 0 : i32
    return %c0_i32, %c0_i32_0 : i32, i32
  }
  func.func @transform_3(%arg0: i32) -> (i32, i32) {
    %c0_i32 = arith.constant 0 : i32
    %c0_i32_0 = arith.constant 0 : i32
    %c0_i32_1 = arith.constant 0 : i32
    return %c0_i32, %c0_i32_0 : i32, i32
  }
  func.func @transform_4(%arg0: i32) -> (i32, i32) {
    %c0_i32 = arith.constant 0 : i32
    %c0_i32_0 = arith.constant 0 : i32
    %c0_i32_1 = arith.constant 0 : i32
    return %c0_i32, %c0_i32_0 : i32, i32
  }
  func.func @transform_5(%arg0: i32) -> (i32, i32) {
    %c0_i32 = arith.constant 0 : i32
    %c0_i32_0 = arith.constant 0 : i32
    %c0_i32_1 = arith.constant 0 : i32
    return %c0_i32, %c0_i32_0 : i32, i32
  }
  func.func @transform_6(%arg0: i32) -> (i32, i32) {
    %c0_i32 = arith.constant 0 : i32
    %c0_i32_0 = arith.constant 0 : i32
    %c0_i32_1 = arith.constant 0 : i32
    return %c0_i32, %c0_i32_0 : i32, i32
  }
  func.func @transform_7(%arg0: i32) -> (i32, i32) {
    %c0_i32 = arith.constant 0 : i32
    %c0_i32_0 = arith.constant 0 : i32
    return %arg0, %c0_i32 : i32, i32
  }
}

</mosaic_0001>

<llo_original>
// kernel: encoder_forward.1
$region0: #{encoder_forward.1}
  #allocation0 [shape = 'u32[]', space=smem, size = 0x4, offset = 0x4, fixed_abs, tag = 'smem constant byte address 0x4 - core index']
  #allocation1 [shape = 'u32[144,128]{1,0:T(1,128)}', space=vmem, size = 0x12000, scoped, tag = 'internal scratch']
  %s0 = inlined_call_operand.vmem [shape: f32[64,32], index: 0, kind: input, shape index: {}]
  %s1 = inlined_call_operand.vmem [shape: bf16[32,128], index: 1, kind: input, shape index: {}]
  %s2 = inlined_call_operand.vmem [shape: f32[1,128], index: 2, kind: input, shape index: {}]
  %s3 = inlined_call_operand.vmem [shape: bf16[128,128], index: 3, kind: input, shape index: {}]
  %s4 = inlined_call_operand.vmem [shape: f32[1,128], index: 4, kind: input, shape index: {}]
  %s5 = inlined_call_operand.hbm [shape: bf16[128,128], index: 5, kind: input, shape index: {}]
  %s6 = inlined_call_operand.vmem [shape: f32[1,128], index: 6, kind: input, shape index: {}]
  %s7 = inlined_call_operand.vmem [shape: bf16[64,128], index: 7, kind: output, shape index: {}]
  %s8 = sld [smem:[#allocation0]]
  $region65: #{encoder_forward.1} parent=0
    _
  %s10 = ssub.s32 1, %s8
  %s11 = scalar_select 0, %s10, %s8
  $region1: #{encoder_forward.1} parent=0
    #allocation2 [shape = 'u8[32768]{0}', space=vmem, size = 0x8000, scoped, tag = 'input window, operand 5, single buffered']
    #allocation3 [shape = 's32[2]{0}', space=sflag, size = 0x8, scoped, tag = 'scoped memory for encoder_forward.1']
    %12 = vsyncpa [#allocation3], 0
    loop: start=0, step=1, limit=4
    $region2: #{encoder_forward.1} parent=1 // loop_pre_header
      _
    $region3: #{encoder_forward.1} parent=1 // loop_header
      %s14 = sphi 0, %s18
      %p15 = scmp.ge.s32.totalorder %s14, 4
      %s24 = sphi 0, %s26
      %s27 = sphi 0, %s24
      %s28 = sphi 0, %s27
      %s44 = sphi 0, %s28
      %s48 = sphi 0, %s48
      %s50 = sphi 0, %s48
      %s51 = sphi 0, %s50
      %s65 = sphi 0, %s51
      %s69 = sphi 0, %s69
      %s71 = sphi 0, %s69
      %s72 = sphi 0, %s71
      %s86 = sphi 0, %s72
      %s90 = sphi 0, %s90
      %s92 = sphi 0, %s90
      %s93 = sphi 0, %s92
      %s107 = sphi 0, %s93
      %s111 = sphi 0, %s111
      %s113 = sphi 0, %s111
      %s114 = sphi 0, %s113
      %s128 = sphi 0, %s114
      %s132 = sphi 0, %s132
      %s134 = sphi 0, %s132
      %s135 = sphi 0, %s134
      %s149 = sphi 0, %s135
      %s153 = sphi 0, %s153
      %s155 = sphi 0, %s153
      %s156 = sphi 0, %s155
      %s170 = sphi 0, %s156
      %s176 = sphi 0, %s178
      %s179 = sphi 0, %s176
      %s180 = sphi 0, %s179
      %s196 = sphi 0, %s180
    $region4: #{encoder_forward.1} parent=1 // loop_header_branch
      %17 = sbr.rel (%p15) target = $region8
    $region5: #{encoder_forward.1} parent=1 // loop_body
      %s19 = ssub.s32 %s14, 1
      %s20 = ssub.s32 %s14, 2
      %s21 = sadd.s32 %s14, 1
      %s22 = ssub.s32 %s14, %s21
      %p23 = scmp.eq.s32.totalorder %s22, 0
      %s25 = sadd.s32 %s24, 1
      %s26 = scalar_select %p23, %s24, %s25
      %p29 = pneg %p23
      %p30 = scmp.eq.s32.totalorder %s14, 1
      %p31 = por %p29, %p30
      %p32 = scmp.ne.s32.totalorder %s24, %s27
      %p33 = scmp.eq.s32.totalorder %s14, 0
      %p34 = por %p32, %p33
      %p35 = scmp.ne.s32.totalorder %s24, %s27
      %p36 = scmp.eq.s32.totalorder %s19, 1
      %p37 = por %p35, %p36
      %p38 = scmp.ne.s32.totalorder %s27, %s28
      %p39 = scmp.eq.s32.totalorder %s19, 0
      %p40 = por %p38, %p39
      %p41 = scmp.ne.s32.totalorder %s27, %s28
      %p42 = scmp.eq.s32.totalorder %s20, 1
      %p43 = por %p41, %p42
      %p45 = scmp.ne.s32.totalorder %s28, %s44
      %p46 = scmp.eq.s32.totalorder %s20, 0
      %p47 = por %p45, %p46
      %s49 = sadd.s32 %s48, 1
      %p52 = scmp.eq.s32.totalorder %s14, 1
      %p53 = scmp.ne.s32.totalorder %s48, %s50
      %p54 = scmp.eq.s32.totalorder %s14, 0
      %p55 = por %p53, %p54
      %p56 = scmp.ne.s32.totalorder %s48, %s50
      %p57 = scmp.eq.s32.totalorder %s19, 1
      %p58 = por %p56, %p57
      %p59 = scmp.ne.s32.totalorder %s50, %s51
      %p60 = scmp.eq.s32.totalorder %s19, 0
      %p61 = por %p59, %p60
      %p62 = scmp.ne.s32.totalorder %s50, %s51
      %p63 = scmp.eq.s32.totalorder %s20, 1
      %p64 = por %p62, %p63
      %p66 = scmp.ne.s32.totalorder %s51, %s65
      %p67 = scmp.eq.s32.totalorder %s20, 0
      %p68 = por %p66, %p67
      %s70 = sadd.s32 %s69, 1
      %p73 = scmp.eq.s32.totalorder %s14, 1
      %p74 = scmp.ne.s32.totalorder %s69, %s71
      %p75 = scmp.eq.s32.totalorder %s14, 0
      %p76 = por %p74, %p75
      %p77 = scmp.ne.s32.totalorder %s69, %s71
      %p78 = scmp.eq.s32.totalorder %s19, 1
      %p79 = por %p77, %p78
      %p80 = scmp.ne.s32.totalorder %s71, %s72
      %p81 = scmp.eq.s32.totalorder %s19, 0
      %p82 = por %p80, %p81
      %p83 = scmp.ne.s32.totalorder %s71, %s72
      %p84 = scmp.eq.s32.totalorder %s20, 1
      %p85 = por %p83, %p84
      %p87 = scmp.ne.s32.totalorder %s72, %s86
      %p88 = scmp.eq.s32.totalorder %s20, 0
      %p89 = por %p87, %p88
      %s91 = sadd.s32 %s90, 1
      %p94 = scmp.eq.s32.totalorder %s14, 1
      %p95 = scmp.ne.s32.totalorder %s90, %s92
      %p96 = scmp.eq.s32.totalorder %s14, 0
      %p97 = por %p95, %p96
      %p98 = scmp.ne.s32.totalorder %s90, %s92
      %p99 = scmp.eq.s32.totalorder %s19, 1
      %p100 = por %p98, %p99
      %p101 = scmp.ne.s32.totalorder %s92, %s93
      %p102 = scmp.eq.s32.totalorder %s19, 0
      %p103 = por %p101, %p102
      %p104 = scmp.ne.s32.totalorder %s92, %s93
      %p105 = scmp.eq.s32.totalorder %s20, 1
      %p106 = por %p104, %p105
      %p108 = scmp.ne.s32.totalorder %s93, %s107
      %p109 = scmp.eq.s32.totalorder %s20, 0
      %p110 = por %p108, %p109
      %s112 = sadd.s32 %s111, 1
      %p115 = scmp.eq.s32.totalorder %s14, 1
      %p116 = scmp.ne.s32.totalorder %s111, %s113
      %p117 = scmp.eq.s32.totalorder %s14, 0
      %p118 = por %p116, %p117
      %p119 = scmp.ne.s32.totalorder %s111, %s113
      %p120 = scmp.eq.s32.totalorder %s19, 1
      %p121 = por %p119, %p120
      %p122 = scmp.ne.s32.totalorder %s113, %s114
      %p123 = scmp.eq.s32.totalorder %s19, 0
      %p124 = por %p122, %p123
      %p125 = scmp.ne.s32.totalorder %s113, %s114
      %p126 = scmp.eq.s32.totalorder %s20, 1
      %p127 = por %p125, %p126
      %p129 = scmp.ne.s32.totalorder %s114, %s128
      %p130 = scmp.eq.s32.totalorder %s20, 0
      %p131 = por %p129, %p130
      %s133 = sadd.s32 %s132, 1
      %p136 = scmp.eq.s32.totalorder %s14, 1
      %p137 = scmp.ne.s32.totalorder %s132, %s134
      %p138 = scmp.eq.s32.totalorder %s14, 0
      %p139 = por %p137, %p138
      %p140 = scmp.ne.s32.totalorder %s132, %s134
      %p141 = scmp.eq.s32.totalorder %s19, 1
      %p142 = por %p140, %p141
      %p143 = scmp.ne.s32.totalorder %s134, %s135
      %p144 = scmp.eq.s32.totalorder %s19, 0
      %p145 = por %p143, %p144
      %p146 = scmp.ne.s32.totalorder %s134, %s135
      %p147 = scmp.eq.s32.totalorder %s20, 1
      %p148 = por %p146, %p147
      %p150 = scmp.ne.s32.totalorder %s135, %s149
      %p151 = scmp.eq.s32.totalorder %s20, 0
      %p152 = por %p150, %p151
      %s154 = sadd.s32 %s153, 1
      %p157 = scmp.eq.s32.totalorder %s14, 1
      %p158 = scmp.ne.s32.totalorder %s153, %s155
      %p159 = scmp.eq.s32.totalorder %s14, 0
      %p160 = por %p158, %p159
      %p161 = scmp.ne.s32.totalorder %s153, %s155
      %p162 = scmp.eq.s32.totalorder %s19, 1
      %p163 = por %p161, %p162
      %p164 = scmp.ne.s32.totalorder %s155, %s156
      %p165 = scmp.eq.s32.totalorder %s19, 0
      %p166 = por %p164, %p165
      %p167 = scmp.ne.s32.totalorder %s155, %s156
      %p168 = scmp.eq.s32.totalorder %s20, 1
      %p169 = por %p167, %p168
      %p171 = scmp.ne.s32.totalorder %s156, %s170
      %p172 = scmp.eq.s32.totalorder %s20, 0
      %p173 = por %p171, %p172
      %s174 = ssub.s32 %s14, %s21
      %p175 = scmp.eq.s32.totalorder %s174, 0
      %s177 = sadd.s32 %s176, 1
      %s178 = scalar_select %p175, %s176, %s177
      %p181 = pneg %p175
      %p182 = scmp.eq.s32.totalorder %s14, 1
      %p183 = por %p181, %p182
      %p184 = scmp.ne.s32.totalorder %s176, %s179
      %p185 = scmp.eq.s32.totalorder %s14, 0
      %p186 = por %p184, %p185
      %p187 = scmp.ne.s32.totalorder %s176, %s179
      %p188 = scmp.eq.s32.totalorder %s19, 1
      %p189 = por %p187, %p188
      %p190 = scmp.ne.s32.totalorder %s179, %s180
      %p191 = scmp.eq.s32.totalorder %s19, 0
      %p192 = por %p190, %p191
      %p193 = scmp.ne.s32.totalorder %s179, %s180
      %p194 = scmp.eq.s32.totalorder %s20, 1
      %p195 = por %p193, %p194
      %p197 = scmp.ne.s32.totalorder %s180, %s196
      %p198 = scmp.eq.s32.totalorder %s20, 0
      %p199 = por %p197, %p198
      %p200 = scmp.le.s32.totalorder 1, %s14
      %p201 = scmp.lt.s32.totalorder %s14, 3
      %p202 = pnand %p200, %p201
      %p203 = pneg %p202
      // Predicated region
      $region9: #{encoder_forward.1} parent=5 // pred_check
        _
      $region10: #{encoder_forward.1} parent=5 // pred_check_branch
        %205 = sbr.rel (%p202) target = $region12
      $region11: #{encoder_forward.1} parent=5 // pred_region
        %s206 = ssub.s32 %s14, 1
        // Predicated region
        $region13: #{encoder_forward.1} parent=11 // pred_check
          %p207 = pneg %p61
        $region14: #{encoder_forward.1} parent=11 // pred_check_branch
          %209 = sbr.rel (%p207) target = $region16
        $region15: #{encoder_forward.1} parent=11 // pred_region
          _
        $region16: #{encoder_forward.1} parent=11 // pred_fallthru
          _
        // Predicated region
        $region17: #{encoder_forward.1} parent=11 // pred_check
          %p210 = pneg %p82
        $region18: #{encoder_forward.1} parent=11 // pred_check_branch
          %212 = sbr.rel (%p210) target = $region20
        $region19: #{encoder_forward.1} parent=11 // pred_region
          _
        $region20: #{encoder_forward.1} parent=11 // pred_fallthru
          _
        // Predicated region
        $region21: #{encoder_forward.1} parent=11 // pred_check
          %p213 = pneg %p103
        $region22: #{encoder_forward.1} parent=11 // pred_check_branch
          %215 = sbr.rel (%p213) target = $region24
        $region23: #{encoder_forward.1} parent=11 // pred_region
          _
        $region24: #{encoder_forward.1} parent=11 // pred_fallthru
          _
        // Predicated region
        $region25: #{encoder_forward.1} parent=11 // pred_check
          %p216 = pneg %p124
        $region26: #{encoder_forward.1} parent=11 // pred_check_branch
          %218 = sbr.rel (%p216) target = $region28
        $region27: #{encoder_forward.1} parent=11 // pred_region
          _
        $region28: #{encoder_forward.1} parent=11 // pred_fallthru
          _
        // Predicated region
        $region29: #{encoder_forward.1} parent=11 // pred_check
          %p219 = pneg %p145
        $region30: #{encoder_forward.1} parent=11 // pred_check_branch
          %221 = sbr.rel (%p219) target = $region32
        $region31: #{encoder_forward.1} parent=11 // pred_region
          %s223 = ssub.s32 1024, 1024
          %224 = vsyncadd [#allocation3], %s223
          %s225 = sshll.u32 [#allocation2], 4
          %s226 = int_to_ptr.vmem [resolvable:$true] %s225
          %231 = dma.hbm_to_vmem [thread:$0]  %s5, 1024, %s226, [#allocation3], 64, 64, 4
        $region32: #{encoder_forward.1} parent=11 // pred_fallthru
          _
        // Predicated region
        $region33: #{encoder_forward.1} parent=11 // pred_check
          %p232 = pneg %p166
        $region34: #{encoder_forward.1} parent=11 // pred_check_branch
          %234 = sbr.rel (%p232) target = $region36
        $region35: #{encoder_forward.1} parent=11 // pred_region
          _
        $region36: #{encoder_forward.1} parent=11 // pred_fallthru
          _
      $region12: #{encoder_forward.1} parent=5 // pred_fallthru
        _
      %p235 = scmp.lt.s32.totalorder %s14, 2
      // Predicated region
      $region37: #{encoder_forward.1} parent=5 // pred_check
        %p236 = pneg %p235
      $region38: #{encoder_forward.1} parent=5 // pred_check_branch
        %238 = sbr.rel (%p236) target = $region40
      $region39: #{encoder_forward.1} parent=5 // pred_region
        // Predicated region
        $region41: #{encoder_forward.1} parent=39 // pred_check
          %p239 = pneg %p34
        $region42: #{encoder_forward.1} parent=39 // pred_check_branch
          %241 = sbr.rel (%p239) target = $region44
        $region43: #{encoder_forward.1} parent=39 // pred_region
          %s242 = smul.u32 4, %s14
          %p243 = scmp.lt.s32.totalorder %s242, 7
          %s244 = scalar_select %p243, %s242, 7
          %s245 = smul.addr %s244, 8
          %s246 = scalar_lea.vmem %s0, %s245
          %s247 = smul.u32 4, %s14
        $region44: #{encoder_forward.1} parent=39 // pred_fallthru
          _
      $region40: #{encoder_forward.1} parent=5 // pred_fallthru
        _
      %p248 = scmp.le.s32.totalorder 1, %s14
      %p249 = scmp.lt.s32.totalorder %s14, 3
      %p250 = pnand %p248, %p249
      %p251 = pneg %p250
      // Predicated region
      $region45: #{encoder_forward.1} parent=5 // pred_check
        _
      $region46: #{encoder_forward.1} parent=5 // pred_check_branch
        %253 = sbr.rel (%p250) target = $region48
      $region47: #{encoder_forward.1} parent=5 // pred_region
        %s254 = ssub.s32 %s14, 1
        // Predicated region
        $region49: #{encoder_forward.1} parent=47 // pred_check
          %p255 = pneg %p145
        $region50: #{encoder_forward.1} parent=47 // pred_check_branch
          %257 = sbr.rel (%p255) target = $region52
        $region51: #{encoder_forward.1} parent=47 // pred_region
          %258 = dma.done [#allocation3], 1024
        $region52: #{encoder_forward.1} parent=47 // pred_fallthru
          _
        %s259 = smul.u32 4, %s19
        %p260 = scmp.lt.s32.totalorder %s259, 7
        %s261 = scalar_select %p260, %s259, 7
        %s262 = smul.addr %s261, 8
        %s263 = scalar_lea.vmem %s0, %s262
        %p264 = pneg %p40
        %p265 = pneg %p37
        %p266 = pneg %p61
        %p267 = pneg %p58
        %p268 = pneg %p82
        %p269 = pneg %p79
        %p270 = pneg %p103
        %p271 = pneg %p100
        %p272 = pneg %p124
        %p273 = pneg %p121
        %p274 = pneg %p145
        %p275 = pneg %p142
        %p276 = pneg %p166
        %p277 = pneg %p163
        %p278 = pneg %p192
        %p279 = pneg %p189
        %s280 = smul.u32 4, %s19
        %p281 = scmp.lt.s32.totalorder %s280, 7
        %s282 = scalar_select %p281, %s280, 7
        %s283 = smul.addr %s282, 4
        %s284 = scalar_lea.vmem %s7, %s283
        %s285 = smul.u32 4, %s19
        %p286 = scmp.lt.s32.totalorder %s285, 7
        %s287 = scalar_select %p286, %s285, 7
        %s288 = smul.addr %s287, 8
        %s289 = scalar_lea.vmem %s0, %s288
        %s290 = smul.u32 4, %s19
        %s291 = smul.u32 4, %s19
        %p292 = scmp.lt.s32.totalorder %s291, 7
        %s293 = scalar_select %p292, %s291, 7
        %s294 = smul.addr %s293, 4
        %s295 = scalar_lea.vmem %s7, %s294
        %s296 = smul.u32 4, %s19
        %v298 = vld [vmem:[%s289] sm:$0xff]
        %v299 = vld [vmem:[%s289 + $0x8] sm:$0xff]
        %v300 = vld [vmem:[%s289 + $0x10] sm:$0xff]
        %v301 = vld [vmem:[%s289 + $0x18] sm:$0xff]
        %v302 = vpack.c.bf16 %v299, %v298
        %v303 = vpack.c.bf16 %v301, %v300
        %v304 = vld [vmem:[%s1] sm:$0xf]
        %v305 = vld [vmem:[%s1 + $0x4] sm:$0xf]
        %v306 = vld [vmem:[%s1 + $0x8] sm:$0xf]
        %v307 = vld [vmem:[%s1 + $0xc] sm:$0xf]
        %v308 = vld [vmem:[%s2] sm:$0x1]
        %v310 = vlaneseq
        %v311 = vshrl.u32 %v310, 7
        %v312 = vsub.s32 0, %v311
        %v313 = vrot.slane %v308, %v312
        %v319 = vunpack.c.l.b16 %v304
        %v320 = vunpack.c.l.b16 %v305
        %v321 = vunpack.c.l.b16 %v306
        %v322 = vunpack.c.l.b16 %v307
        %v323 = vpack.c.b16 %v320, %v319
        %v324 = vpack.c.b16 %v322, %v321
        %vm327 = vcmask 261120
        %v329 = vsel %vm327, %v302, 0
        %v332 = vsel %vm327, %v303, 0
        %334 = vmatprep.subr.bf16.mxu0 0
        %335 = vmatpush1.bf16.msra.mxu0 %v323
        %336 = vmatprep.subr.bf16.mxu0 0
        %337 = vmatpush1.bf16.msra.mxu0 %v324
        %338 = vmatprep.subr.bf16.mxu0 0
        %339 = vmatpush1.bf16.msra.mxu0 0
        %340 = vmatprep.subr.bf16.mxu0 0
        %341 = vmatpush1.bf16.msra.mxu0 0
        %342 = vmatprep.subr.bf16.mxu0 0
        %343 = vmatpush1.bf16.msra.mxu0 0
        %344 = vmatprep.subr.bf16.mxu0 0
        %345 = vmatpush1.bf16.msra.mxu0 0
        %346 = vmatprep.subr.bf16.mxu0 0
        %347 = vmatpush1.bf16.msra.mxu0 0
        %348 = vmatprep.subr.bf16.mxu0 0
        %349 = vmatpush1.bf16.msra.mxu0 0
        %350 = vmatprep.subr.bf16.mxu0 0
        %351 = vmatpush1.bf16.msra.mxu0 0
        %352 = vmatprep.subr.bf16.mxu0 0
        %353 = vmatpush1.bf16.msra.mxu0 0
        %354 = vmatprep.subr.bf16.mxu0 0
        %355 = vmatpush1.bf16.msra.mxu0 0
        %356 = vmatprep.subr.bf16.mxu0 0
        %357 = vmatpush1.bf16.msra.mxu0 0
        %358 = vmatprep.subr.bf16.mxu0 0
        %359 = vmatpush1.bf16.msra.mxu0 0
        %360 = vmatprep.subr.bf16.mxu0 0
        %361 = vmatpush1.bf16.msra.mxu0 0
        %362 = vmatprep.subr.bf16.mxu0 0
        %363 = vmatpush1.bf16.msra.mxu0 0
        %364 = vmatprep.subr.bf16.mxu0 0
        %365 = vmatpush1.bf16.msra.mxu0 0
        %366 = vmatprep.mubr.bf16.mxu0 0
        %367 = vmatmul.mubr.bf16.gmra.mrb[0].mxu0 %v329
        %v368 = vpop.f32.mrb[0].mxu0
        %v369 = vadd.f32 %v313, %v368
        %v370 = vpop.f32.mrb[0].mxu0
        %v371 = vpop.f32.mrb[0].mxu0
        %v372 = vadd.f32 %v313, %v371
        %v373 = vpop.f32.mrb[0].mxu0
        %374 = vmatprep.mubr.bf16.mxu0 0
        %375 = vmatmul.mubr.bf16.gmra.mrb[0].mxu0 %v332
        %v376 = vpop.f32.mrb[0].mxu0
        %v377 = vadd.f32 %v313, %v376
        %v378 = vpop.f32.mrb[0].mxu0
        %v379 = vpop.f32.mrb[0].mxu0
        %v380 = vadd.f32 %v313, %v379
        %v381 = vpop.f32.mrb[0].mxu0
        %382 = vdwg.mxu0
        %vm383 = vcmp.gt.f32.partialorder %v369, 0.0
        %vm384 = vcmp.gt.f32.partialorder %v372, 0.0
        %vm385 = vcmp.gt.f32.partialorder %v377, 0.0
        %vm386 = vcmp.gt.f32.partialorder %v380, 0.0
        %v387 = vmul.f32 %v369, 0.2
        %v388 = vmul.f32 %v372, 0.2
        %v389 = vmul.f32 %v377, 0.2
        %v390 = vmul.f32 %v380, 0.2
        %v391 = vsel %vm383, %v369, %v387
        %v392 = vsel %vm384, %v372, %v388
        %v393 = vsel %vm385, %v377, %v389
        %v394 = vsel %vm386, %v380, %v390
        %v395 = vpack.c.bf16 %v392, %v391
        %v396 = vpack.c.bf16 %v394, %v393
        %v397 = vld [vmem:[%s3] sm:$0xf]
        %v398 = vld [vmem:[%s3 + $0x4] sm:$0xf]
        %v399 = vld [vmem:[%s3 + $0x8] sm:$0xf]
        %v400 = vld [vmem:[%s3 + $0xc] sm:$0xf]
        %v401 = vld [vmem:[%s3 + $0x10] sm:$0xf]
        %v402 = vld [vmem:[%s3 + $0x14] sm:$0xf]
        %v403 = vld [vmem:[%s3 + $0x18] sm:$0xf]
        %v404 = vld [vmem:[%s3 + $0x1c] sm:$0xf]
        %v405 = vld [vmem:[%s3 + $0x20] sm:$0xf]
        %v406 = vld [vmem:[%s3 + $0x24] sm:$0xf]
        %v407 = vld [vmem:[%s3 + $0x28] sm:$0xf]
        %v408 = vld [vmem:[%s3 + $0x2c] sm:$0xf]
        %v409 = vld [vmem:[%s3 + $0x30] sm:$0xf]
        %v410 = vld [vmem:[%s3 + $0x34] sm:$0xf]
        %v411 = vld [vmem:[%s3 + $0x38] sm:$0xf]
        %v412 = vld [vmem:[%s3 + $0x3c] sm:$0xf]
        %v413 = vld [vmem:[%s4] sm:$0x1]
        %v415 = vlaneseq
        %v416 = vshrl.u32 %v415, 7
        %v417 = vsub.s32 0, %v416
        %v418 = vrot.slane %v413, %v417
        %v436 = vunpack.c.l.b16 %v397
        %v437 = vunpack.c.l.b16 %v398
        %v438 = vunpack.c.l.b16 %v399
        %v439 = vunpack.c.l.b16 %v400
        %v440 = vunpack.c.l.b16 %v401
        %v441 = vunpack.c.l.b16 %v402
        %v442 = vunpack.c.l.b16 %v403
        %v443 = vunpack.c.l.b16 %v404
        %v444 = vunpack.c.l.b16 %v405
        %v445 = vunpack.c.l.b16 %v406
        %v446 = vunpack.c.l.b16 %v407
        %v447 = vunpack.c.l.b16 %v408
        %v448 = vunpack.c.l.b16 %v409
        %v449 = vunpack.c.l.b16 %v410
        %v450 = vunpack.c.l.b16 %v411
        %v451 = vunpack.c.l.b16 %v412
        %v452 = vpack.c.b16 %v437, %v436
        %v453 = vpack.c.b16 %v439, %v438
        %v454 = vpack.c.b16 %v441, %v440
        %v455 = vpack.c.b16 %v443, %v442
        %v456 = vpack.c.b16 %v445, %v444
        %v457 = vpack.c.b16 %v447, %v446
        %v458 = vpack.c.b16 %v449, %v448
        %v459 = vpack.c.b16 %v451, %v450
        %468 = vmatprep.subr.bf16.mxu0 0
        %469 = vmatpush1.bf16.msra.mxu0 %v452
        %470 = vmatprep.subr.bf16.mxu0 0
        %471 = vmatpush1.bf16.msra.mxu0 %v453
        %472 = vmatprep.subr.bf16.mxu0 0
        %473 = vmatpush1.bf16.msra.mxu0 %v454
        %474 = vmatprep.subr.bf16.mxu0 0
        %475 = vmatpush1.bf16.msra.mxu0 %v455
        %476 = vmatprep.subr.bf16.mxu0 0
        %477 = vmatpush1.bf16.msra.mxu0 %v456
        %478 = vmatprep.subr.bf16.mxu0 0
        %479 = vmatpush1.bf16.msra.mxu0 %v457
        %480 = vmatprep.subr.bf16.mxu0 0
        %481 = vmatpush1.bf16.msra.mxu0 %v458
        %482 = vmatprep.subr.bf16.mxu0 0
        %483 = vmatpush1.bf16.msra.mxu0 %v459
        %484 = vmatprep.subr.bf16.mxu0 0
        %485 = vmatpush1.bf16.msra.mxu0 0
        %486 = vmatprep.subr.bf16.mxu0 0
        %487 = vmatpush1.bf16.msra.mxu0 0
        %488 = vmatprep.subr.bf16.mxu0 0
        %489 = vmatpush1.bf16.msra.mxu0 0
        %490 = vmatprep.subr.bf16.mxu0 0
        %491 = vmatpush1.bf16.msra.mxu0 0
        %492 = vmatprep.subr.bf16.mxu0 0
        %493 = vmatpush1.bf16.msra.mxu0 0
        %494 = vmatprep.subr.bf16.mxu0 0
        %495 = vmatpush1.bf16.msra.mxu0 0
        %496 = vmatprep.subr.bf16.mxu0 0
        %497 = vmatpush1.bf16.msra.mxu0 0
        %498 = vmatprep.subr.bf16.mxu0 0
        %499 = vmatpush1.bf16.msra.mxu0 0
        %500 = vmatprep.mubr.bf16.mxu0 0
        %501 = vmatmul.mubr.bf16.gmra.mrb[0].mxu0 %v395
        %v502 = vpop.f32.mrb[0].mxu0
        %v503 = vadd.f32 %v418, %v502
        %v504 = vpop.f32.mrb[0].mxu0
        %v505 = vpop.f32.mrb[0].mxu0
        %v506 = vadd.f32 %v418, %v505
        %v507 = vpop.f32.mrb[0].mxu0
        %508 = vmatprep.mubr.bf16.mxu0 0
        %509 = vmatmul.mubr.bf16.gmra.mrb[0].mxu0 %v396
        %v510 = vpop.f32.mrb[0].mxu0
        %v511 = vadd.f32 %v418, %v510
        %v512 = vpop.f32.mrb[0].mxu0
        %v513 = vpop.f32.mrb[0].mxu0
        %v514 = vadd.f32 %v418, %v513
        %v515 = vpop.f32.mrb[0].mxu0
        %516 = vdwg.mxu0
        %vm517 = vcmp.gt.f32.partialorder %v503, 0.0
        %vm518 = vcmp.gt.f32.partialorder %v506, 0.0
        %vm519 = vcmp.gt.f32.partialorder %v511, 0.0
        %vm520 = vcmp.gt.f32.partialorder %v514, 0.0
        %v521 = vmul.f32 %v503, 0.2
        %v522 = vmul.f32 %v506, 0.2
        %v523 = vmul.f32 %v511, 0.2
        %v524 = vmul.f32 %v514, 0.2
        %v525 = vsel %vm517, %v503, %v521
        %v526 = vsel %vm518, %v506, %v522
        %v527 = vsel %vm519, %v511, %v523
        %v528 = vsel %vm520, %v514, %v524
        %v529 = vpack.c.bf16 %v526, %v525
        %v530 = vpack.c.bf16 %v528, %v527
        %v531 = vld [vmem:[#allocation2] sm:$0xf]
        %v532 = vld [vmem:[#allocation2 + $0x4] sm:$0xf]
        %v533 = vld [vmem:[#allocation2 + $0x8] sm:$0xf]
        %v534 = vld [vmem:[#allocation2 + $0xc] sm:$0xf]
        %v535 = vld [vmem:[#allocation2 + $0x10] sm:$0xf]
        %v536 = vld [vmem:[#allocation2 + $0x14] sm:$0xf]
        %v537 = vld [vmem:[#allocation2 + $0x18] sm:$0xf]
        %v538 = vld [vmem:[#allocation2 + $0x1c] sm:$0xf]
        %v539 = vld [vmem:[#allocation2 + $0x20] sm:$0xf]
        %v540 = vld [vmem:[#allocation2 + $0x24] sm:$0xf]
        %v541 = vld [vmem:[#allocation2 + $0x28] sm:$0xf]
        %v542 = vld [vmem:[#allocation2 + $0x2c] sm:$0xf]
        %v543 = vld [vmem:[#allocation2 + $0x30] sm:$0xf]
        %v544 = vld [vmem:[#allocation2 + $0x34] sm:$0xf]
        %v545 = vld [vmem:[#allocation2 + $0x38] sm:$0xf]
        %v546 = vld [vmem:[#allocation2 + $0x3c] sm:$0xf]
        %v547 = vld [vmem:[%s6] sm:$0x1]
        %v549 = vlaneseq
        %v550 = vshrl.u32 %v549, 7
        %v551 = vsub.s32 0, %v550
        %v552 = vrot.slane %v547, %v551
        %v570 = vunpack.c.l.b16 %v531
        %v571 = vunpack.c.l.b16 %v532
        %v572 = vunpack.c.l.b16 %v533
        %v573 = vunpack.c.l.b16 %v534
        %v574 = vunpack.c.l.b16 %v535
        %v575 = vunpack.c.l.b16 %v536
        %v576 = vunpack.c.l.b16 %v537
        %v577 = vunpack.c.l.b16 %v538
        %v578 = vunpack.c.l.b16 %v539
        %v579 = vunpack.c.l.b16 %v540
        %v580 = vunpack.c.l.b16 %v541
        %v581 = vunpack.c.l.b16 %v542
        %v582 = vunpack.c.l.b16 %v543
        %v583 = vunpack.c.l.b16 %v544
        %v584 = vunpack.c.l.b16 %v545
        %v585 = vunpack.c.l.b16 %v546
        %v586 = vpack.c.b16 %v571, %v570
        %v587 = vpack.c.b16 %v573, %v572
        %v588 = vpack.c.b16 %v575, %v574
        %v589 = vpack.c.b16 %v577, %v576
        %v590 = vpack.c.b16 %v579, %v578
        %v591 = vpack.c.b16 %v581, %v580
        %v592 = vpack.c.b16 %v583, %v582
        %v593 = vpack.c.b16 %v585, %v584
        %602 = vmatprep.subr.bf16.mxu0 0
        %603 = vmatpush1.bf16.msra.mxu0 %v586
        %604 = vmatprep.subr.bf16.mxu0 0
        %605 = vmatpush1.bf16.msra.mxu0 %v587
        %606 = vmatprep.subr.bf16.mxu0 0
        %607 = vmatpush1.bf16.msra.mxu0 %v588
        %608 = vmatprep.subr.bf16.mxu0 0
        %609 = vmatpush1.bf16.msra.mxu0 %v589
        %610 = vmatprep.subr.bf16.mxu0 0
        %611 = vmatpush1.bf16.msra.mxu0 %v590
        %612 = vmatprep.subr.bf16.mxu0 0
        %613 = vmatpush1.bf16.msra.mxu0 %v591
        %614 = vmatprep.subr.bf16.mxu0 0
        %615 = vmatpush1.bf16.msra.mxu0 %v592
        %616 = vmatprep.subr.bf16.mxu0 0
        %617 = vmatpush1.bf16.msra.mxu0 %v593
        %618 = vmatprep.subr.bf16.mxu0 0
        %619 = vmatpush1.bf16.msra.mxu0 0
        %620 = vmatprep.subr.bf16.mxu0 0
        %621 = vmatpush1.bf16.msra.mxu0 0
        %622 = vmatprep.subr.bf16.mxu0 0
        %623 = vmatpush1.bf16.msra.mxu0 0
        %624 = vmatprep.subr.bf16.mxu0 0
        %625 = vmatpush1.bf16.msra.mxu0 0
        %626 = vmatprep.subr.bf16.mxu0 0
        %627 = vmatpush1.bf16.msra.mxu0 0
        %628 = vmatprep.subr.bf16.mxu0 0
        %629 = vmatpush1.bf16.msra.mxu0 0
        %630 = vmatprep.subr.bf16.mxu0 0
        %631 = vmatpush1.bf16.msra.mxu0 0
        %632 = vmatprep.subr.bf16.mxu0 0
        %633 = vmatpush1.bf16.msra.mxu0 0
        %634 = vmatprep.mubr.bf16.mxu0 0
        %635 = vmatmul.mubr.bf16.gmra.mrb[0].mxu0 %v529
        %v636 = vpop.f32.mrb[0].mxu0
        %v637 = vadd.f32 %v552, %v636
        %v638 = vpop.f32.mrb[0].mxu0
        %v639 = vpop.f32.mrb[0].mxu0
        %v640 = vadd.f32 %v552, %v639
        %v641 = vpop.f32.mrb[0].mxu0
        %642 = vmatprep.mubr.bf16.mxu0 0
        %643 = vmatmul.mubr.bf16.gmra.mrb[0].mxu0 %v530
        %v644 = vpop.f32.mrb[0].mxu0
        %v645 = vadd.f32 %v552, %v644
        %v646 = vpop.f32.mrb[0].mxu0
        %v647 = vpop.f32.mrb[0].mxu0
        %v648 = vadd.f32 %v552, %v647
        %v649 = vpop.f32.mrb[0].mxu0
        %650 = vdwg.mxu0
        %v651 = vpack.c.bf16 %v640, %v637
        %v652 = vpack.c.bf16 %v648, %v645
        %v655 = vunpack.c.l.b16 %v651
        %v656 = vunpack.c.h.b16 %v651
        %v657 = vunpack.c.l.b16 %v652
        %v658 = vunpack.c.h.b16 %v652
        %v659 = vpack.c.b16 %v655, %v655
        %v660 = vpack.c.b16 %v656, %v656
        %v661 = vpack.c.b16 %v657, %v657
        %v662 = vpack.c.b16 %v658, %v658
        %667 = vst [vmem:[%s295] sm:$0xf] %v659
        %668 = vst [vmem:[%s295 + $0x4] sm:$0xf] %v660
        %669 = vst [vmem:[%s295 + $0x8] sm:$0xf] %v661
        %670 = vst [vmem:[%s295 + $0xc] sm:$0xf] %v662
        %s671 = smul.u32 4, %s19
        %p672 = scmp.lt.s32.totalorder %s671, 7
        %s673 = scalar_select %p672, %s671, 7
        %s674 = smul.addr %s673, 4
        %s675 = scalar_lea.vmem %s7, %s674
        // Predicated region
        $region53: #{encoder_forward.1} parent=47 // pred_check
          %p676 = pneg %p189
        $region54: #{encoder_forward.1} parent=47 // pred_check_branch
          %678 = sbr.rel (%p676) target = $region56
        $region55: #{encoder_forward.1} parent=47 // pred_region
          %s679 = smul.u32 4, %s19
        $region56: #{encoder_forward.1} parent=47 // pred_fallthru
          _
      $region48: #{encoder_forward.1} parent=5 // pred_fallthru
        _
      %p680 = scmp.le.s32.totalorder 2, %s14
      // Predicated region
      $region57: #{encoder_forward.1} parent=5 // pred_check
        %p681 = pneg %p680
      $region58: #{encoder_forward.1} parent=5 // pred_check_branch
        %683 = sbr.rel (%p681) target = $region60
      $region59: #{encoder_forward.1} parent=5 // pred_region
        %s684 = ssub.s32 %s14, 2
        // Predicated region
        $region61: #{encoder_forward.1} parent=59 // pred_check
          %p685 = pneg %p195
        $region62: #{encoder_forward.1} parent=59 // pred_check_branch
          %687 = sbr.rel (%p685) target = $region64
        $region63: #{encoder_forward.1} parent=59 // pred_region
          %s688 = smul.u32 4, %s20
          %p689 = scmp.lt.s32.totalorder %s688, 7
          %s690 = scalar_select %p689, %s688, 7
          %s691 = smul.addr %s690, 4
          %s692 = scalar_lea.vmem %s7, %s691
        $region64: #{encoder_forward.1} parent=59 // pred_fallthru
          _
      $region60: #{encoder_forward.1} parent=5 // pred_fallthru
        _
    $region6: #{encoder_forward.1} parent=1 // loop_footer
      %s18 = sadd.s32 1, %s14
    $region7: #{encoder_forward.1} parent=1 // loop_footer_branch
      %13 = sbr.rel target = $region3
    $region8: #{encoder_forward.1} parent=1 // loop_exit
      _
    %693 = vsyncpa [#allocation3], 1
    %s694 = scalar_lea.sflag [#allocation3], 1
    %695 = vsyncpa %s694, 1

</llo_original>
